<compile_context>
chip_gen: v7x
topology: tpu7x:2x2x1
jax: 0.10.0
libtpu: 0.0.40
codegen_flags: <defaults>
</compile_context>

<pallas_src>
import functools

import numpy as np
import jax
import jax.numpy as jnp
from jax.experimental import pallas as pl
from jax.experimental.pallas import tpu as pltpu


# ----------------------------- Pallas kernels -----------------------------

def _features(x, u_ref, b_ref, w_ref):
    """fc1(relu(conv1(x)).view(-1,180)) with the conv as a single MXU matmul."""
    f = jnp.dot(x, u_ref[...], preferred_element_type=jnp.float32)   # conv (unfolded)
    f = jnp.maximum(f + b_ref[...], 0.0)                             # + bias, relu
    return jnp.dot(f, w_ref[...], preferred_element_type=jnp.float32)  # fc1 (no bias)


def _fwd_relu_kernel(x_ref, u_ref, b_ref, w_ref, o_ref):
    # relu branch: relu(fc1(relu(conv1(x)).view(-1,180)))
    # x_ref:(N,64) u_ref:(64,180) b_ref:(1,180) w_ref:(180,10) o_ref:(N,10)
    o_ref[...] = jnp.maximum(_features(x_ref[...], u_ref, b_ref, w_ref), 0.0)


def _fwd_loo_kernel(s_ref, y_ref, xz_ref, u_ref, b_ref, w_ref, g_ref,
                    *, n_query, m_train, shared):
    # s_ref: SMEM (1,)       = 0.5 / h^2          (precomputed)
    # y_ref: SMEM (m_train,) = labels Y
    # xz_ref: (n_query, 64) when shared else (n_query + m_train, 64)
    # u_ref:(64,180) b_ref:(1,180) w_ref:(180,10) g_ref:(n_query,10)
    feats = _features(xz_ref[...], u_ref, b_ref, w_ref)   # ONE matmul chain for all rows
    if shared:
        zw = feats                                        # query == train set
        xw = feats
    else:
        zw = feats[:n_query, :]                           # fc1(relu(conv1(x)))
        xw = feats[n_query:, :]                           # fc1(relu(conv1(train_X)))

    scale = s_ref[0]                                      # 0.5/h^2 (no /h per element)
    nf = zw.shape[-1]
    row_ids = jax.lax.broadcasted_iota(jnp.int32, (n_query, nf), 0)
    numer = jnp.zeros((n_query, nf), jnp.float32)
    denom = jnp.zeros((n_query, nf), jnp.float32)
    # Static unrolled loop over the (small) training set; tmp[j] = 0 is the
    # leave-one-out masking from the torch code.
    # TODO(synk): for large m_train, tile the train axis on a grid (query axis
    # "parallel") instead of fully unrolling here.
    for j in range(m_train):
        d = xw[j:j + 1, :] - zw                           # (n_query, 10)
        t = jnp.exp(-(d * d) * scale)                     # gauss((Xw-Zw)/h), a=1,mu=0,sigma=1
        t = jnp.where(row_ids == j, 0.0, t)               # tmp[j] = 0
        numer = numer + t * y_ref[j]
        denom = denom + t
    g_ref[...] = numer * pl.reciprocal(denom, approx=True)


# ----------------------------- pallas_call wrappers -----------------------------

def _vmem():
    return pl.BlockSpec(memory_space=pltpu.MemorySpace.VMEM)


def _smem():
    return pl.BlockSpec(memory_space=pltpu.MemorySpace.SMEM)


def forward_relu(x_flat, U, b_flat, fc_wt):
    n = x_flat.shape[0]
    return pl.pallas_call(
        _fwd_relu_kernel,
        out_shape=jax.ShapeDtypeStruct((n, fc_wt.shape[1]), jnp.float32),
        in_specs=[_vmem(), _vmem(), _vmem(), _vmem()],
        out_specs=_vmem(),
    )(x_flat, U, b_flat, fc_wt)


def forward_loo(x_flat, tx_flat, Y, h, U, b_flat, fc_wt, *, shared):
    n = x_flat.shape[0]
    m = tx_flat.shape[0]
    scale = jnp.reshape(0.5 / (h.astype(jnp.float32) ** 2), (1,))
    y_arr = jnp.reshape(Y, (-1,)).astype(jnp.float32)
    xz = x_flat if shared else jnp.concatenate([x_flat, tx_flat], axis=0)
    kernel = functools.partial(_fwd_loo_kernel, n_query=n, m_train=m, shared=shared)
    return pl.pallas_call(
        kernel,
        out_shape=jax.ShapeDtypeStruct((n, fc_wt.shape[1]), jnp.float32),
        in_specs=[_smem(), _smem(), _vmem(), _vmem(), _vmem(), _vmem()],
        out_specs=_vmem(),
    )(scale, y_arr, xz, U, b_flat, fc_wt)


# ----------------------------- parameter setup (one-time, hoisted) -----------------------------

def prepare_params(conv_w, conv_b, fc_w):
    """One-time preprocessing of Net parameters (hoisted out of the forward).

    Unfolds Conv2d(1,5,3,1) into U:(64,180) so that
      relu(x_flat @ U + b_flat) == relu(conv1(x)).view(-1, 180)
    with torch's channel-major flatten order (col = c*36 + i*6 + j), and
    pre-transposes the bias-free fc1 weight to (180, 10).
    """
    w = np.asarray(conv_w, np.float32)[:, 0]          # (5, 3, 3)
    b = np.asarray(conv_b, np.float32)                # (5,)
    U = np.zeros((64, 180), np.float32)
    for c in range(5):
        for i in range(6):
            for j in range(6):
                col = c * 36 + i * 6 + j
                for di in range(3):
                    for dj in range(3):
                        U[(i + di) * 8 + (j + dj), col] = w[c, di, dj]
    b_flat = np.repeat(b, 36).reshape(1, 180)
    return (jnp.asarray(U), jnp.asarray(b_flat), jnp.asarray(fc_w).T)


def net_forward(x, prepared, h, settings, train_X=None, Y=None):
    U, b_flat, fc_wt = prepared
    x_flat = x.reshape(x.shape[0], 64).astype(jnp.float32)        # free row-major collapse
    if settings["activation"] == "leave_one_out":
        shared = train_X is x                                     # self-LOO: dedupe features
        if shared:
            tx_flat = x_flat
        else:
            tx_flat = train_X.reshape(train_X.shape[0], 64).astype(jnp.float32)
        return forward_loo(x_flat, tx_flat, Y, h, U, b_flat, fc_wt, shared=shared)
    return forward_relu(x_flat, U, b_flat, fc_wt)


# ----------------------------- pure-JAX reference -----------------------------

def _gauss_ref(x):
    return jnp.exp(-(x ** 2) / 2.0)


def net_forward_ref(x, params, settings, train_X=None, Y=None):
    conv_w, conv_b, fc_w, h = params

    def feat(inp):
        N = inp.shape[0]
        out = jnp.zeros((N, 5, 6, 6), jnp.float32)
        for di in range(3):
            for dj in range(3):
                out = out + (inp[:, 0, di:di + 6, dj:dj + 6][:, None, :, :]
                             * conv_w[:, 0, di, dj][None, :, None, None])
        out = jnp.maximum(out + conv_b[None, :, None, None], 0.0)
        return out.reshape(N, 180)

    xw = feat(x)
    if settings["activation"] == "leave_one_out":
        zw = xw @ fc_w.T
        num = 0.0
        den = 0.0
        for j in range(train_X.shape[0]):
            Xwj = feat(train_X[j:j + 1]) @ fc_w.T           # (1, 10)
            tmp = _gauss_ref((Xwj - zw) / h)                # (N, 10)
            tmp = tmp.at[j].set(0.0)
            den = den + tmp
            num = num + tmp * Y[j]
        return num / den
    return jnp.maximum(xw @ fc_w.T, 0.0)


# ----------------------------- main -----------------------------

if __name__ == "__main__":
    key = jax.random.PRNGKey(0)
    k1, k2, k3, k4, k5, k6 = jax.random.split(key, 6)

    # Deterministic synthetic parameters (shapes from Net.__init__).
    # Small scale keeps the h=0.05 Nadaraya-Watson kernel numerically tame.
    conv_w = 0.1 * jax.random.normal(k1, (5, 1, 3, 3), jnp.float32)   # Conv2d(1,5,3,1).weight
    conv_b = 0.1 * jax.random.normal(k2, (5,), jnp.float32)           # Conv2d(1,5,3,1).bias
    fc_w = 0.05 * jax.random.normal(k3, (10, 180), jnp.float32)       # Linear(180,10,bias=False).weight
    h = jnp.float32(0.05)                                             # nn.Parameter(0.05)

    prepared = prepare_params(conv_w, conv_b, fc_w)   # one-time hoisted setup
    params_ref = (conv_w, conv_b, fc_w, h)

    # Inputs: (N,1,8,8); leave_one_out is the self-LOO case (train set == query batch).
    x = 0.1 * jax.random.normal(k4, (2, 1, 8, 8), jnp.float32)
    Y = jax.random.normal(k5, (2,), jnp.float32)

    # Branch 1: settings['activation'] != 'leave_one_out'  ->  relu(fc1(xw))
    y_relu = jax.block_until_ready(net_forward(x, prepared, h, {"activation": "relu"}))
    y_relu_ref = net_forward_ref(x, params_ref, {"activation": "relu"})
    assert y_relu.shape == (2, 10)
    assert jnp.allclose(y_relu, y_relu_ref, rtol=1e-2, atol=1e-3), "relu branch mismatch"

    # Branch 2a: leave_one_out with train_X is x (shared/self path, one feature pass)
    y_loo = jax.block_until_ready(
        net_forward(x, prepared, h, {"activation": "leave_one_out"},
                    train_X=x, Y=Y))
    y_loo_ref = net_forward_ref(x, params_ref, {"activation": "leave_one_out"},
                                train_X=x, Y=Y)
    assert y_loo.shape == (2, 10)
    assert jnp.allclose(y_loo, y_loo_ref, rtol=1e-2, atol=1e-3, equal_nan=True), \
        "leave_one_out (shared) branch mismatch"

    # Branch 2b: leave_one_out with a distinct train set (general path, concat input)
    train_X2 = 0.1 * jax.random.normal(k6, (2, 1, 8, 8), jnp.float32)
    y_loo2 = jax.block_until_ready(
        net_forward(x, prepared, h, {"activation": "leave_one_out"},
                    train_X=train_X2, Y=Y))
    y_loo2_ref = net_forward_ref(x, params_ref, {"activation": "leave_one_out"},
                                 train_X=train_X2, Y=Y)
    assert y_loo2.shape == (2, 10)
    assert jnp.allclose(y_loo2, y_loo2_ref, rtol=1e-2, atol=1e-3, equal_nan=True), \
        "leave_one_out (general) branch mismatch"

    print("KERNEL_OK")
</pallas_src>

<mosaic_0001>
module attributes {stable_mosaic.version = 11 : i64} {
  func.func @_fwd_relu_kernel(%arg0: memref<2x64xf32, #tpu.memory_space<vmem>>, %arg1: memref<64x180xf32, #tpu.memory_space<vmem>>, %arg2: memref<1x180xf32, #tpu.memory_space<vmem>>, %arg3: memref<180x10xf32, #tpu.memory_space<vmem>>, %arg4: memref<2x10xf32, #tpu.memory_space<vmem>>) attributes {dimension_semantics = [], scalar_prefetch = 0 : i64, scratch_operands = 0 : i64, tpu.core_type = #tpu.core_type<tc>} {
    %c0 = arith.constant 0 : index
    %c0_0 = arith.constant 0 : index
    %0 = vector.load %arg0[%c0, %c0_0] : memref<2x64xf32, #tpu.memory_space<vmem>>, vector<2x64xf32>
    %c0_1 = arith.constant 0 : index
    %c0_2 = arith.constant 0 : index
    %1 = vector.load %arg1[%c0_1, %c0_2] : memref<64x180xf32, #tpu.memory_space<vmem>>, vector<64x180xf32>
    %cst = arith.constant dense<0.000000e+00> : vector<2x180xf32>
    %2 = tpu.matmul %0, %1, %cst {dimension_numbers = #tpu.dot_dimension_numbers<[1], [0], [0], [1], [0, 0, 1, 1], [], []>} : vector<2x64xf32>, vector<64x180xf32>, vector<2x180xf32> -> vector<2x180xf32>
    %c0_3 = arith.constant 0 : index
    %c0_4 = arith.constant 0 : index
    %3 = vector.load %arg2[%c0_3, %c0_4] : memref<1x180xf32, #tpu.memory_space<vmem>>, vector<1x180xf32>
    %4 = vector.broadcast %3 : vector<1x180xf32> to vector<2x180xf32>
    %5 = arith.addf %2, %4 : vector<2x180xf32>
    %cst_5 = arith.constant 0.000000e+00 : f32
    %6 = vector.broadcast %cst_5 : f32 to vector<2x180xf32>
    %7 = arith.maximumf %5, %6 : vector<2x180xf32>
    %c0_6 = arith.constant 0 : index
    %c0_7 = arith.constant 0 : index
    %8 = vector.load %arg3[%c0_6, %c0_7] : memref<180x10xf32, #tpu.memory_space<vmem>>, vector<180x10xf32>
    %cst_8 = arith.constant dense<0.000000e+00> : vector<2x10xf32>
    %9 = tpu.matmul %7, %8, %cst_8 {dimension_numbers = #tpu.dot_dimension_numbers<[1], [0], [0], [1], [0, 0, 1, 1], [], []>} : vector<2x180xf32>, vector<180x10xf32>, vector<2x10xf32> -> vector<2x10xf32>
    %cst_9 = arith.constant 0.000000e+00 : f32
    %10 = vector.broadcast %cst_9 : f32 to vector<2x10xf32>
    %11 = arith.maximumf %9, %10 : vector<2x10xf32>
    %c0_10 = arith.constant 0 : index
    %c0_11 = arith.constant 0 : index
    %12 = vector.load %arg4[%c0_10, %c0_11] : memref<2x10xf32, #tpu.memory_space<vmem>>, vector<2x10xf32>
    tpu.vector_store %arg4[%c0_10, %c0_11], %11 {strides = array<i32>} : memref<2x10xf32, #tpu.memory_space<vmem>>, vector<2x10xf32>,
    return
  }
}

</mosaic_0001>

<llo_original>
// kernel: tpu_custom_call.1
$region0: #{tpu_custom_call.1}
  #allocation0 [shape = 'u32[]', space=smem, size = 0x4, offset = 0x4, fixed_abs, tag = 'smem constant byte address 0x4 - core index']
  #allocation1 [shape = 'u32[144,128]{1,0:T(1,128)}', space=vmem, size = 0x12000, scoped, tag = 'internal scratch']
  %s0 = inlined_call_operand.vmem [shape: f32[2,64], index: 0, kind: input, shape index: {}]
  %s1 = inlined_call_operand.vmem [shape: f32[64,180], index: 1, kind: input, shape index: {}]
  %s2 = inlined_call_operand.vmem [shape: f32[1,180], index: 2, kind: input, shape index: {}]
  %s3 = inlined_call_operand.vmem [shape: f32[180,10], index: 3, kind: input, shape index: {}]
  %s4 = inlined_call_operand.hbm [shape: f32[2,10], index: 4, kind: output, shape index: {}]
  %s5 = sld [smem:[#allocation0]]
  $region26: #{tpu_custom_call.1} parent=0
    _
  %s7 = ssub.s32 1, %s5
  %s8 = scalar_select 0, %s7, %s5
  $region1: #{tpu_custom_call.1} parent=0
    #allocation2 [shape = 'u8[1024]{0}', space=vmem, size = 0x400, scoped, tag = 'output window, operand 0, single buffered']
    #allocation3 [shape = 's32[1]{0}', space=sflag, size = 0x4, scoped, tag = 'scoped memory for tpu_custom_call.1']
    %9 = vsyncpa [#allocation3], 0
    // Predicated region
    $region2: #{tpu_custom_call.1} parent=1 // pred_check
      _
    $region3: #{tpu_custom_call.1} parent=1 // pred_check_branch
      %11 = sbr.rel (0) target = $region5
    $region4: #{tpu_custom_call.1} parent=1 // pred_region
      _
    $region5: #{tpu_custom_call.1} parent=1 // pred_fallthru
      _
    // Predicated region
    $region6: #{tpu_custom_call.1} parent=1 // pred_check
      _
    $region7: #{tpu_custom_call.1} parent=1 // pred_check_branch
      %13 = sbr.rel (0) target = $region9
    $region8: #{tpu_custom_call.1} parent=1 // pred_region
      _
    $region9: #{tpu_custom_call.1} parent=1 // pred_fallthru
      _
    // Predicated region
    $region10: #{tpu_custom_call.1} parent=1 // pred_check
      _
    $region11: #{tpu_custom_call.1} parent=1 // pred_check_branch
      %15 = sbr.rel (0) target = $region13
    $region12: #{tpu_custom_call.1} parent=1 // pred_region
      _
    $region13: #{tpu_custom_call.1} parent=1 // pred_fallthru
      _
    // Predicated region
    $region14: #{tpu_custom_call.1} parent=1 // pred_check
      _
    $region15: #{tpu_custom_call.1} parent=1 // pred_check_branch
      %17 = sbr.rel (0) target = $region17
    $region16: #{tpu_custom_call.1} parent=1 // pred_region
      _
    $region17: #{tpu_custom_call.1} parent=1 // pred_fallthru
      _
    %v18 = vld [vmem:[%s0] sm:$0x3]
    %v19 = vld [vmem:[%s1] sm:$0xff]
    %v20 = vld [vmem:[%s1 + $0x8] sm:$0xff]
    %v21 = vld [vmem:[%s1 + $0x10] sm:$0xff]
    %v22 = vld [vmem:[%s1 + $0x18] sm:$0xff]
    %v23 = vld [vmem:[%s1 + $0x20] sm:$0xff]
    %v24 = vld [vmem:[%s1 + $0x28] sm:$0xff]
    %v25 = vld [vmem:[%s1 + $0x30] sm:$0xff]
    %v26 = vld [vmem:[%s1 + $0x38] sm:$0xff]
    %v27 = vld [vmem:[%s1 + $0x40] sm:$0xff]
    %v28 = vld [vmem:[%s1 + $0x48] sm:$0xff]
    %v29 = vld [vmem:[%s1 + $0x50] sm:$0xff]
    %v30 = vld [vmem:[%s1 + $0x58] sm:$0xff]
    %v31 = vld [vmem:[%s1 + $0x60] sm:$0xff]
    %v32 = vld [vmem:[%s1 + $0x68] sm:$0xff]
    %v33 = vld [vmem:[%s1 + $0x70] sm:$0xff]
    %v34 = vld [vmem:[%s1 + $0x78] sm:$0xff]
    %v35 = vld [vmem:[%s2] sm:$0x3]
    %v37 = vlaneseq
    %v38 = vshrl.u32 %v37, 7
    %v39 = vsub.s32 0, %v38
    %v40 = vrot.slane %v35, %v39
    %v41 = vlaneseq
    %v42 = vshrl.u32 %v41, 7
    %v43 = vsub.s32 1, %v42
    %v44 = vrot.slane %v35, %v43
    %vm47 = vcmask 523264
    %v49 = vsel %vm47, %v18, 0
    %51 = vmatprep.subr.mxu0 %v20
    %52 = vmatpush1.msra.mxu0 %v19
    %53 = vmatprep.subr.mxu0 %v22
    %54 = vmatpush1.msra.mxu0 %v21
    %55 = vmatprep.subr.mxu0 %v24
    %56 = vmatpush1.msra.mxu0 %v23
    %57 = vmatprep.subr.mxu0 %v26
    %58 = vmatpush1.msra.mxu0 %v25
    %59 = vmatprep.subr.mxu0 %v28
    %60 = vmatpush1.msra.mxu0 %v27
    %61 = vmatprep.subr.mxu0 %v30
    %62 = vmatpush1.msra.mxu0 %v29
    %63 = vmatprep.subr.mxu0 %v32
    %64 = vmatpush1.msra.mxu0 %v31
    %65 = vmatprep.subr.mxu0 %v34
    %66 = vmatpush1.msra.mxu0 %v33
    %67 = vmatprep.subr.mxu0 0.0
    %68 = vmatpush1.msra.mxu0 0.0
    %69 = vmatprep.subr.mxu0 0.0
    %70 = vmatpush1.msra.mxu0 0.0
    %71 = vmatprep.subr.mxu0 0.0
    %72 = vmatpush1.msra.mxu0 0.0
    %73 = vmatprep.subr.mxu0 0.0
    %74 = vmatpush1.msra.mxu0 0.0
    %75 = vmatprep.subr.mxu0 0.0
    %76 = vmatpush1.msra.mxu0 0.0
    %77 = vmatprep.subr.mxu0 0.0
    %78 = vmatpush1.msra.mxu0 0.0
    %79 = vmatprep.subr.mxu0 0.0
    %80 = vmatpush1.msra.mxu0 0.0
    %81 = vmatprep.subr.mxu0 0.0
    %82 = vmatpush1.msra.mxu0 0.0
    %83 = vmatprep.subr.mxu0 0.0
    %84 = vmatpush1.msra.mxu0 0.0
    %85 = vmatprep.subr.mxu0 0.0
    %86 = vmatpush1.msra.mxu0 0.0
    %87 = vmatprep.subr.mxu0 0.0
    %88 = vmatpush1.msra.mxu0 0.0
    %89 = vmatprep.subr.mxu0 0.0
    %90 = vmatpush1.msra.mxu0 0.0
    %91 = vmatprep.subr.mxu0 0.0
    %92 = vmatpush1.msra.mxu0 0.0
    %93 = vmatprep.subr.mxu0 0.0
    %94 = vmatpush1.msra.mxu0 0.0
    %95 = vmatprep.subr.mxu0 0.0
    %96 = vmatpush1.msra.mxu0 0.0
    %97 = vmatprep.subr.mxu0 0.0
    %98 = vmatpush1.msra.mxu0 0.0
    %99 = vmatprep.subr.mxu0 0.0
    %100 = vmatpush1.msra.mxu0 0.0
    %101 = vmatprep.subr.mxu0 0.0
    %102 = vmatpush1.msra.mxu0 0.0
    %103 = vmatprep.subr.mxu0 0.0
    %104 = vmatpush1.msra.mxu0 0.0
    %105 = vmatprep.subr.mxu0 0.0
    %106 = vmatpush1.msra.mxu0 0.0
    %107 = vmatprep.subr.mxu0 0.0
    %108 = vmatpush1.msra.mxu0 0.0
    %109 = vmatprep.subr.mxu0 0.0
    %110 = vmatpush1.msra.mxu0 0.0
    %111 = vmatprep.subr.mxu0 0.0
    %112 = vmatpush1.msra.mxu0 0.0
    %113 = vmatprep.subr.mxu0 0.0
    %114 = vmatpush1.msra.mxu0 0.0
    %115 = vmatprep.mubr.f32.mxu0 0.0
    %116 = vmatmul.mubr.f32.gmra.mrb[0].mxu0 %v49
    %v117 = vpop.f32.mrb[0].mxu0
    %v118 = vadd.f32 %v40, %v117
    %v119 = vpop.f32.mrb[0].mxu0
    %v120 = vadd.f32 %v44, %v119
    %121 = vdwg.mxu0
    %v122 = vmax.f32 %v118, 0.0
    %v123 = vmax.f32 %v120, 0.0
    %v124 = vld [vmem:[%s3] sm:$0xff]
    %v125 = vld [vmem:[%s3 + $0x8] sm:$0xff]
    %v126 = vld [vmem:[%s3 + $0x10] sm:$0xff]
    %v127 = vld [vmem:[%s3 + $0x18] sm:$0xff]
    %v128 = vld [vmem:[%s3 + $0x20] sm:$0xff]
    %v129 = vld [vmem:[%s3 + $0x28] sm:$0xff]
    %v130 = vld [vmem:[%s3 + $0x30] sm:$0xff]
    %v131 = vld [vmem:[%s3 + $0x38] sm:$0xff]
    %v132 = vld [vmem:[%s3 + $0x40] sm:$0xff]
    %v133 = vld [vmem:[%s3 + $0x48] sm:$0xff]
    %v134 = vld [vmem:[%s3 + $0x50] sm:$0xff]
    %v135 = vld [vmem:[%s3 + $0x58] sm:$0xff]
    %v136 = vld [vmem:[%s3 + $0x60] sm:$0xff]
    %v137 = vld [vmem:[%s3 + $0x68] sm:$0xff]
    %v138 = vld [vmem:[%s3 + $0x70] sm:$0xff]
    %v139 = vld [vmem:[%s3 + $0x78] sm:$0xff]
    %v140 = vld [vmem:[%s3 + $0x80] sm:$0xff]
    %v141 = vld [vmem:[%s3 + $0x88] sm:$0xff]
    %v142 = vld [vmem:[%s3 + $0x90] sm:$0xff]
    %v143 = vld [vmem:[%s3 + $0x98] sm:$0xff]
    %v144 = vld [vmem:[%s3 + $0xa0] sm:$0xff]
    %v145 = vld [vmem:[%s3 + $0xa8] sm:$0xff]
    %v146 = vld [vmem:[%s3 + $0xb0] sm:$0xf]
    %vm147 = vcmask 424960
    %v149 = vsel %vm147, %v123, 0
    %vm151 = vcmask 1043456
    %v153 = vsel %vm151, %v146, 0
    %155 = vmatprep.subr.mxu0 0.0
    %156 = vmatpush1.msra.mxu0 %v124
    %157 = vmatprep.subr.mxu0 0.0
    %158 = vmatpush1.msra.mxu0 %v125
    %159 = vmatprep.subr.mxu0 0.0
    %160 = vmatpush1.msra.mxu0 %v126
    %161 = vmatprep.subr.mxu0 0.0
    %162 = vmatpush1.msra.mxu0 %v127
    %163 = vmatprep.subr.mxu0 0.0
    %164 = vmatpush1.msra.mxu0 %v128
    %165 = vmatprep.subr.mxu0 0.0
    %166 = vmatpush1.msra.mxu0 %v129
    %167 = vmatprep.subr.mxu0 0.0
    %168 = vmatpush1.msra.mxu0 %v130
    %169 = vmatprep.subr.mxu0 0.0
    %170 = vmatpush1.msra.mxu0 %v131
    %171 = vmatprep.subr.mxu0 0.0
    %172 = vmatpush1.msra.mxu0 %v132
    %173 = vmatprep.subr.mxu0 0.0
    %174 = vmatpush1.msra.mxu0 %v133
    %175 = vmatprep.subr.mxu0 0.0
    %176 = vmatpush1.msra.mxu0 %v134
    %177 = vmatprep.subr.mxu0 0.0
    %178 = vmatpush1.msra.mxu0 %v135
    %179 = vmatprep.subr.mxu0 0.0
    %180 = vmatpush1.msra.mxu0 %v136
    %181 = vmatprep.subr.mxu0 0.0
    %182 = vmatpush1.msra.mxu0 %v137
    %183 = vmatprep.subr.mxu0 0.0
    %184 = vmatpush1.msra.mxu0 %v138
    %185 = vmatprep.subr.mxu0 0.0
    %186 = vmatpush1.msra.mxu0 %v139
    %187 = vmatprep.subr.mxu0 0.0
    %188 = vmatpush1.msra.mxu0 %v140
    %189 = vmatprep.subr.mxu0 0.0
    %190 = vmatpush1.msra.mxu0 %v141
    %191 = vmatprep.subr.mxu0 0.0
    %192 = vmatpush1.msra.mxu0 %v142
    %193 = vmatprep.subr.mxu0 0.0
    %194 = vmatpush1.msra.mxu0 %v143
    %195 = vmatprep.subr.mxu0 0.0
    %196 = vmatpush1.msra.mxu0 %v144
    %197 = vmatprep.subr.mxu0 0.0
    %198 = vmatpush1.msra.mxu0 %v145
    %199 = vmatprep.subr.mxu0 0.0
    %200 = vmatpush1.msra.mxu0 %v153
    %201 = vmatprep.subr.mxu0 0.0
    %202 = vmatpush1.msra.mxu0 0.0
    %203 = vmatprep.subr.mxu0 0.0
    %204 = vmatpush1.msra.mxu0 0.0
    %205 = vmatprep.subr.mxu0 0.0
    %206 = vmatpush1.msra.mxu0 0.0
    %207 = vmatprep.subr.mxu0 0.0
    %208 = vmatpush1.msra.mxu0 0.0
    %209 = vmatprep.subr.mxu0 0.0
    %210 = vmatpush1.msra.mxu0 0.0
    %211 = vmatprep.subr.mxu0 0.0
    %212 = vmatpush1.msra.mxu0 0.0
    %213 = vmatprep.subr.mxu0 0.0
    %214 = vmatpush1.msra.mxu0 0.0
    %215 = vmatprep.subr.mxu0 0.0
    %216 = vmatpush1.msra.mxu0 0.0
    %217 = vmatprep.subr.mxu0 0.0
    %218 = vmatpush1.msra.mxu0 0.0
    %219 = vmatprep.mubr.f32.mxu0 %v149
    %220 = vmatmul.mubr.f32.gmra.mrb[0].mxu0 %v122
    %v221 = vpop.f32.mrb[0].mxu0
    %v222 = vadd.f32 0.0, %v221
    %v223 = vpop.f32.mrb[0].mxu0
    %224 = vdwg.mxu0
    %v225 = vmax.f32 %v222, 0.0
    %vm226 = vcmask 74752
    %227 = vst.msk [vmem:[#allocation2] sm:$0x3] %vm226, %v225
    // Predicated region
    $region18: #{tpu_custom_call.1} parent=1 // pred_check
      _
    $region19: #{tpu_custom_call.1} parent=1 // pred_check_branch
      %229 = sbr.rel (0) target = $region21
    $region20: #{tpu_custom_call.1} parent=1 // pred_region
      %s231 = ssub.s32 32, 32
      %232 = vsyncadd [#allocation3], %s231
      %s234 = sshll.u32 [#allocation2], 4
      %s235 = int_to_ptr.vmem [resolvable:$true] %s234
      %237 = dma.vmem_to_hbm [thread:$0]  %s235, 32, %s4, [#allocation3]
    $region21: #{tpu_custom_call.1} parent=1 // pred_fallthru
      _
    // Predicated region
    $region22: #{tpu_custom_call.1} parent=1 // pred_check
      _
    $region23: #{tpu_custom_call.1} parent=1 // pred_check_branch
      %239 = sbr.rel (0) target = $region25
    $region24: #{tpu_custom_call.1} parent=1 // pred_region
      %240 = dma.done [#allocation3], 32
    $region25: #{tpu_custom_call.1} parent=1 // pred_fallthru
      _
    %241 = vsyncpa [#allocation3], 1

</llo_original>
